<compile_context>
chip_gen: v7x
topology: tpu7x:2x2x1
jax: 0.10.0
libtpu: 0.0.40
codegen_flags: <defaults>
</compile_context>

<pallas_src>
import math

import jax
import jax.numpy as jnp
from jax.experimental import pallas as pl
from jax.experimental.pallas import tpu as pltpu


LN_EPS = 1e-5                      # torch.nn.LayerNorm default eps
_INV_SQRT2 = 1.0 / math.sqrt(2.0)  # exact-erf GELU constant


# ----------------------------------------------------------------------------
# Kernels
# ----------------------------------------------------------------------------
def _gelu_layernorm_f32(y, p_f32):
    """Exact-erf GELU then LayerNorm over the last dim, all in f32.

    p_f32 is the packed (3, H) [bias, gamma, beta] block (bias already applied).
    Uses fused sum / sum-of-squares stats (two independent XLU reductions).
    """
    g = 0.5 * y * (1.0 + jax.lax.erf(y * jnp.float32(_INV_SQRT2)))
    inv_h = jnp.float32(1.0 / g.shape[-1])
    s1 = jnp.sum(g, axis=-1, keepdims=True)
    s2 = jnp.sum(g * g, axis=-1, keepdims=True)
    mean = s1 * inv_h
    var = s2 * inv_h - mean * mean          # biased variance (LayerNorm default)
    normed = (g - mean) * jax.lax.rsqrt(var + jnp.float32(LN_EPS))
    gamma = p_f32[1:2, :]
    beta = p_f32[2:3, :]
    return normed * gamma + beta


def _level_kernel(x_ref, w_ref, p_ref, o_ref):
    """Fused Linear -> GELU -> LayerNorm over one (TM, H) row tile, resident W."""
    p = p_ref[...].astype(jnp.float32)
    y = jnp.dot(x_ref[...], w_ref[...], preferred_element_type=jnp.float32)
    y = y + p[0:1, :]                       # Linear bias
    o_ref[...] = _gelu_layernorm_f32(y, p).astype(o_ref.dtype)


def _level_kernel_ktiled(x_ref, w_ref, p_ref, o_ref, acc_ref):
    """K-tiled variant: accumulate x@W over the D_in grid axis, finalize on last k."""
    k = pl.program_id(1)

    @pl.when(k == 0)
    def _():
        acc_ref[...] = jnp.zeros_like(acc_ref)

    acc_ref[...] += jnp.dot(x_ref[...], w_ref[...],
                            preferred_element_type=jnp.float32)

    @pl.when(k == pl.num_programs(1) - 1)
    def _():
        p = p_ref[...].astype(jnp.float32)
        y = acc_ref[...] + p[0:1, :]
        o_ref[...] = _gelu_layernorm_f32(y, p).astype(o_ref.dtype)


# ----------------------------------------------------------------------------
# Tiling / VMEM policy
# ----------------------------------------------------------------------------
def _round_up(x, m):
    return ((x + m - 1) // m) * m


def _sublane_align(dtype):
    # f32 -> 8, bf16 -> 16, int8/fp8 -> 32 (sublane packing of the output tile).
    itemsize = jnp.dtype(dtype).itemsize
    return max(8, 32 // max(itemsize, 1))


def _vmem_policy():
    """(planning_budget_bytes, vmem_limit_cap_bytes) per TPU generation."""
    try:
        cap = int(pltpu.get_tpu_info().vmem_capacity_bytes)
    except Exception:
        cap = 64 << 20  # conservative fallback: v7x per-TC VMEM
    if cap >= (128 << 20):          # v5e / v6e: 128 MiB physical VMEM
        return 64 << 20, 96 << 20
    # 64 MiB parts (v7x per TC): leave headroom for compiler scratch / temporaries.
    return 36 << 20, 48 << 20


def _pick_tiles(M, D_in, H, in_bytes, out_bytes, w_bytes, budget, sub_align):
    """Choose (tm, tk). tk is None when the whole weight stays VMEM-resident."""
    h_pad = _round_up(H, 128)
    resident_p = 2 * 8 * h_pad * 4                     # packed (3,H) params, tile-padded, x2 buffers

    def per_row(k_dim, with_acc):
        # double-buffered x row + out row + ~4 live f32 (·,H) temporaries
        return (2 * (k_dim * in_bytes + H * out_bytes)
                + (5 if with_acc else 4) * H * 4)

    tk = None
    resident_w = 2 * D_in * H * w_bytes                # Mosaic double-buffers inputs by default
    if resident_w + resident_p + 64 * per_row(D_in, False) > budget:
        # Weight too large to keep resident next to useful row tiles: K-tile it.
        tk = max(((budget // 3) // (2 * H * w_bytes)) // 128 * 128, 128)
        tk = min(tk, _round_up(D_in, 128))
        resident_w = 2 * tk * H * w_bytes
        rows = per_row(tk, True)
    else:
        rows = per_row(D_in, False)

    avail = max(budget - resident_w - resident_p, rows * sub_align)
    tm = min(max(avail // rows, sub_align), 1024)      # >=512-1024 rows ~ 85% of HBM roofline
    # Keep >= ~8 row tiles when M allows (megacore sharding + DMA pipelining),
    # but never shrink below ~256 rows just to manufacture grid steps.
    desired = _round_up(pl.cdiv(M, 8), sub_align)
    tm = min(tm, max(desired, min(256, _round_up(M, sub_align))))
    tm = max((tm // sub_align) * sub_align, sub_align)
    tm = min(tm, _round_up(M, sub_align))
    return int(tm), (int(tk) if tk is not None else None)


# ----------------------------------------------------------------------------
# Wrapper
# ----------------------------------------------------------------------------
def wubu_level_forward(input_tangent_p, input_origin_p, params, *, tm=None, tk=None):
    """Pallas-backed forward of HyperbolicWuBuNestingLevel.

    Args:
      input_tangent_p: (B, S, D_in)
      input_origin_p:  passed through unchanged
      params: dict with 'w' (D_in, H), 'b' (H,), 'gamma' (H,), 'beta' (H,),
              'curvature' scalar.
      tm: optional row-tile override.  tk: optional K-tile override (forces the
          K-tiled accumulator path).
    Returns:
      (input_origin_p, level_features_tangent (B, S, H), curvature)
    """
    B, S, D_in = input_tangent_p.shape
    H = params["w"].shape[1]
    M = B * S

    x2d = input_tangent_p.reshape(M, D_in)
    w = params["w"]
    # Linear bias + LN gamma/beta packed into one resident (3, H) block.
    p3 = jnp.stack([params["b"], params["gamma"], params["beta"]]).astype(jnp.float32)

    in_bytes = jnp.dtype(x2d.dtype).itemsize
    w_bytes = jnp.dtype(w.dtype).itemsize
    out_bytes = in_bytes
    sub_align = _sublane_align(x2d.dtype)

    budget, limit_cap = _vmem_policy()
    auto_tm, auto_tk = _pick_tiles(M, D_in, H, in_bytes, out_bytes, w_bytes,
                                   budget, sub_align)
    if tm is None:
        tm = auto_tm
    if tk is None:
        tk = auto_tk
    tm = int(max(sub_align, (tm // sub_align) * sub_align))
    tm = min(tm, _round_up(M, sub_align))

    grid_m = pl.cdiv(M, tm)  # ragged final block is masked by Pallas (no pad/slice)

    cost = pl.CostEstimate(
        flops=2 * M * D_in * H,
        transcendentals=M * H,               # erf per output element
        bytes_accessed=(M * D_in * in_bytes + D_in * H * w_bytes
                        + 3 * H * 4 + M * H * out_bytes),
    )

    # TODO(synk): for MXU-bound shapes on v6e/v7x, optionally cast x/w to bf16
    # at this boundary (keeping f32 accumulation); left as f32 for bit-fidelity.

    if tk is None:
        vmem_need = (2 * D_in * H * w_bytes + 2 * 8 * _round_up(H, 128) * 4
                     + 2 * tm * (D_in * in_bytes + H * out_bytes)
                     + 4 * tm * H * 4)
        vmem_limit = int(min(max(vmem_need + (4 << 20), 32 << 20), limit_cap))

        out2d = pl.pallas_call(
            _level_kernel,
            out_shape=jax.ShapeDtypeStruct((M, H), input_tangent_p.dtype),
            grid_spec=pl.GridSpec(
                grid=(grid_m,),
                in_specs=[
                    pl.BlockSpec((tm, D_in), lambda i: (i, 0)),   # x: row tiles
                    pl.BlockSpec((D_in, H), lambda i: (0, 0)),    # weight: resident
                    pl.BlockSpec((3, H), lambda i: (0, 0)),       # bias/gamma/beta
                ],
                out_specs=pl.BlockSpec((tm, H), lambda i: (i, 0)),
            ),
            compiler_params=pltpu.CompilerParams(
                dimension_semantics=("parallel",),
                vmem_limit_bytes=vmem_limit,
            ),
            cost_estimate=cost,
        )(x2d, w, p3)
    else:
        # K-tiled path: weight streamed in (tk, H) slabs, f32 accumulator in VMEM.
        # Zero-pad K to a multiple of tk (exact: padded columns contribute 0).
        k_pad = _round_up(D_in, tk)
        if k_pad != D_in:
            x2d = jnp.pad(x2d, ((0, 0), (0, k_pad - D_in)))
            w = jnp.pad(w, ((0, k_pad - D_in), (0, 0)))
        grid_k = k_pad // tk

        vmem_need = (2 * tk * H * w_bytes + 2 * 8 * _round_up(H, 128) * 4
                     + 2 * tm * (tk * in_bytes + H * out_bytes)
                     + tm * H * 4                      # f32 accumulator scratch
                     + 4 * tm * H * 4)
        vmem_limit = int(min(max(vmem_need + (4 << 20), 32 << 20), limit_cap))

        out2d = pl.pallas_call(
            _level_kernel_ktiled,
            out_shape=jax.ShapeDtypeStruct((M, H), input_tangent_p.dtype),
            grid_spec=pltpu.PrefetchScalarGridSpec(
                num_scalar_prefetch=0,
                grid=(grid_m, grid_k),                 # reduction axis last
                in_specs=[
                    pl.BlockSpec((tm, tk), lambda i, k: (i, k)),
                    pl.BlockSpec((tk, H), lambda i, k: (k, 0)),
                    pl.BlockSpec((3, H), lambda i, k: (0, 0)),
                ],
                out_specs=pl.BlockSpec((tm, H), lambda i, k: (i, 0)),
                scratch_shapes=[pltpu.VMEM((tm, H), jnp.float32)],
            ),
            compiler_params=pltpu.CompilerParams(
                dimension_semantics=("parallel", "arbitrary"),
                vmem_limit_bytes=vmem_limit,
            ),
            cost_estimate=cost,
        )(x2d, w, p3)

    level_features_tangent = out2d.reshape(B, S, H)
    # Identity pass-through of origin + scalar curvature (no kernel work needed).
    return input_origin_p, level_features_tangent, params["curvature"]


# ----------------------------------------------------------------------------
# Params / reference
# ----------------------------------------------------------------------------
def init_params(key, input_dim, hyperbolic_dim, init_std_factor=0.02, curv_val=1.0):
    """Mirror init_weights_general: xavier_uniform with gain = gain('relu') *
    init_std_factor, Linear bias = 0, LayerNorm weight = 1 / bias = 0,
    curvature = curv_val."""
    gain = math.sqrt(2.0) * init_std_factor
    fan_in, fan_out = input_dim, hyperbolic_dim
    bound = gain * math.sqrt(6.0 / (fan_in + fan_out))
    # torch Linear weight is (out, in); store pre-transposed (in, out).
    w_t = jax.random.uniform(
        key, (fan_out, fan_in), minval=-bound, maxval=bound, dtype=jnp.float32
    )
    return {
        "w": jnp.transpose(w_t),                            # (D_in, H)
        "b": jnp.zeros((hyperbolic_dim,), jnp.float32),     # Linear bias
        "gamma": jnp.ones((hyperbolic_dim,), jnp.float32),  # LayerNorm weight
        "beta": jnp.zeros((hyperbolic_dim,), jnp.float32),  # LayerNorm bias
        "curvature": jnp.float32(curv_val),                 # learnable curvature
    }


def reference_forward(input_tangent_p, input_origin_p, params):
    """Plain-JAX reference for correctness check."""
    y = jnp.einsum("bsd,dh->bsh", input_tangent_p, params["w"]) + params["b"]
    g = 0.5 * y * (1.0 + jax.lax.erf(y / jnp.sqrt(2.0)))
    mean = jnp.mean(g, axis=-1, keepdims=True)
    var = jnp.mean((g - mean) ** 2, axis=-1, keepdims=True)
    normed = (g - mean) / jnp.sqrt(var + LN_EPS)
    feats = normed * params["gamma"] + params["beta"]
    return input_origin_p, feats, params["curvature"]


if __name__ == "__main__":
    key = jax.random.PRNGKey(0)
    k_x, k_o, k_w, k_x2, k_o2, k_w3, k_x3, k_o3 = jax.random.split(key, 8)

    # Case 1: default single-weight-resident path; hyperbolic_dim = 128 keeps
    # the output last dim lane-dense.
    B, S, D_IN, H = 2, 8, 32, 128
    input_tangent_p = jax.random.normal(k_x, (B, S, D_IN), dtype=jnp.float32)
    input_origin_p = jax.random.normal(k_o, (B, S, D_IN), dtype=jnp.float32)
    params = init_params(k_w, D_IN, H, init_std_factor=0.02, curv_val=1.0)

    origin_out, feats, curv = wubu_level_forward(input_tangent_p, input_origin_p, params)
    jax.block_until_ready(feats)
    _, feats_ref, _ = reference_forward(input_tangent_p, input_origin_p, params)
    assert feats.shape == (B, S, H)
    assert origin_out.shape == input_origin_p.shape
    assert jnp.allclose(origin_out, input_origin_p)
    assert jnp.allclose(feats, feats_ref, atol=2e-5, rtol=2e-5)
    assert jnp.allclose(curv, 1.0)

    # Case 2: ragged row count (M = 120, tm = 32 -> 4 row tiles, last one
    # partial) exercising the pad-free masked final block.
    B2, S2 = 3, 40
    xt2 = jax.random.normal(k_x2, (B2, S2, D_IN), dtype=jnp.float32)
    xo2 = jax.random.normal(k_o2, (B2, S2, D_IN), dtype=jnp.float32)
    _, feats2, _ = wubu_level_forward(xt2, xo2, params, tm=32)
    jax.block_until_ready(feats2)
    _, feats2_ref, _ = reference_forward(xt2, xo2, params)
    assert feats2.shape == (B2, S2, H)
    assert jnp.allclose(feats2, feats2_ref, atol=2e-5, rtol=2e-5)

    # Case 3: forced K-tiled accumulator path (D_in = 192 zero-padded to 256,
    # tk = 128 -> 2 K steps, 3 row tiles).
    D_IN3 = 192
    params3 = init_params(k_w3, D_IN3, H, init_std_factor=0.02, curv_val=1.0)
    xt3 = jax.random.normal(k_x3, (2, 24, D_IN3), dtype=jnp.float32)
    xo3 = jax.random.normal(k_o3, (2, 24, D_IN3), dtype=jnp.float32)
    _, feats3, _ = wubu_level_forward(xt3, xo3, params3, tm=16, tk=128)
    jax.block_until_ready(feats3)
    _, feats3_ref, _ = reference_forward(xt3, xo3, params3)
    assert feats3.shape == (2, 24, H)
    assert jnp.allclose(feats3, feats3_ref, atol=2e-5, rtol=2e-5)

    print("KERNEL_OK")
</pallas_src>

<mosaic_0001>
module attributes {stable_mosaic.version = 11 : i64} {
  func.func @_level_kernel(%arg0: i32, %arg1: memref<16x32xf32, #tpu.memory_space<vmem>>, %arg2: memref<32x128xf32, #tpu.memory_space<vmem>>, %arg3: memref<3x128xf32, #tpu.memory_space<vmem>>, %arg4: memref<16x128xf32, #tpu.memory_space<vmem>>) attributes {dimension_semantics = [#tpu.dimension_semantics<parallel>], iteration_bounds = array<i64: 1>, scalar_prefetch = 0 : i64, scratch_operands = 0 : i64, tpu.core_type = #tpu.core_type<tc>, window_params = [{transform_indices = @transform_0, window_bounds = array<i64: 16, 32>}, {pipeline_mode = #tpu.pipeline_mode<synchronous>, transform_indices = @transform_1, window_bounds = array<i64: 32, 128>}, {pipeline_mode = #tpu.pipeline_mode<synchronous>, transform_indices = @transform_2, window_bounds = array<i64: 3, 128>}, {transform_indices = @transform_3, window_bounds = array<i64: 16, 128>}]} {
    %c0 = arith.constant 0 : index
    %c0_0 = arith.constant 0 : index
    %0 = vector.load %arg3[%c0, %c0_0] : memref<3x128xf32, #tpu.memory_space<vmem>>, vector<3x128xf32>
    %c0_1 = arith.constant 0 : index
    %c0_2 = arith.constant 0 : index
    %1 = vector.load %arg1[%c0_1, %c0_2] : memref<16x32xf32, #tpu.memory_space<vmem>>, vector<16x32xf32>
    %c0_3 = arith.constant 0 : index
    %c0_4 = arith.constant 0 : index
    %2 = vector.load %arg2[%c0_3, %c0_4] : memref<32x128xf32, #tpu.memory_space<vmem>>, vector<32x128xf32>
    %cst = arith.constant dense<0.000000e+00> : vector<16x128xf32>
    %3 = tpu.matmul %1, %2, %cst {dimension_numbers = #tpu.dot_dimension_numbers<[1], [0], [0], [1], [0, 0, 1, 1], [], []>} : vector<16x32xf32>, vector<32x128xf32>, vector<16x128xf32> -> vector<16x128xf32>
    %4 = vector.extract_strided_slice %0 {offsets = [0, 0], sizes = [1, 128], strides = [1, 1]} : vector<3x128xf32> to vector<1x128xf32>
    %5 = vector.broadcast %4 : vector<1x128xf32> to vector<16x128xf32>
    %6 = arith.addf %3, %5 : vector<16x128xf32>
    %cst_5 = arith.constant 5.000000e-01 : f32
    %7 = vector.broadcast %cst_5 : f32 to vector<16x128xf32>
    %8 = arith.mulf %7, %6 : vector<16x128xf32>
    %cst_6 = arith.constant 0.707106769 : f32
    %9 = vector.broadcast %cst_6 : f32 to vector<16x128xf32>
    %10 = arith.mulf %6, %9 : vector<16x128xf32>
    %11 = math.erf %10 : vector<16x128xf32>
    %cst_7 = arith.constant 1.000000e+00 : f32
    %12 = vector.broadcast %cst_7 : f32 to vector<16x128xf32>
    %13 = arith.addf %12, %11 : vector<16x128xf32>
    %14 = arith.mulf %8, %13 : vector<16x128xf32>
    %cst_8 = arith.constant dense<0.000000e+00> : vector<16xf32>
    %15 = vector.multi_reduction <add>, %14, %cst_8 [1] : vector<16x128xf32> to vector<16xf32>
    %16 = vector.shape_cast %15 : vector<16xf32> to vector<16x1xf32>
    %17 = arith.mulf %14, %14 : vector<16x128xf32>
    %cst_9 = arith.constant dense<0.000000e+00> : vector<16xf32>
    %18 = vector.multi_reduction <add>, %17, %cst_9 [1] : vector<16x128xf32> to vector<16xf32>
    %19 = vector.shape_cast %18 : vector<16xf32> to vector<16x1xf32>
    %cst_10 = arith.constant 7.812500e-03 : f32
    %20 = vector.broadcast %cst_10 : f32 to vector<16x1xf32>
    %21 = arith.mulf %16, %20 : vector<16x1xf32>
    %cst_11 = arith.constant 7.812500e-03 : f32
    %22 = vector.broadcast %cst_11 : f32 to vector<16x1xf32>
    %23 = arith.mulf %19, %22 : vector<16x1xf32>
    %24 = arith.mulf %21, %21 : vector<16x1xf32>
    %25 = arith.subf %23, %24 : vector<16x1xf32>
    %26 = vector.broadcast %21 : vector<16x1xf32> to vector<16x128xf32>
    %27 = arith.subf %14, %26 : vector<16x128xf32>
    %cst_12 = arith.constant 9.99999974E-6 : f32
    %28 = vector.broadcast %cst_12 : f32 to vector<16x1xf32>
    %29 = arith.addf %25, %28 : vector<16x1xf32>
    %30 = math.rsqrt %29 : vector<16x1xf32>
    %31 = vector.broadcast %30 : vector<16x1xf32> to vector<16x128xf32>
    %32 = arith.mulf %27, %31 : vector<16x128xf32>
    %33 = vector.extract_strided_slice %0 {offsets = [1, 0], sizes = [1, 128], strides = [1, 1]} : vector<3x128xf32> to vector<1x128xf32>
    %34 = vector.extract_strided_slice %0 {offsets = [2, 0], sizes = [1, 128], strides = [1, 1]} : vector<3x128xf32> to vector<1x128xf32>
    %35 = vector.broadcast %33 : vector<1x128xf32> to vector<16x128xf32>
    %36 = arith.mulf %32, %35 : vector<16x128xf32>
    %37 = vector.broadcast %34 : vector<1x128xf32> to vector<16x128xf32>
    %38 = arith.addf %36, %37 : vector<16x128xf32>
    %c0_13 = arith.constant 0 : index
    %c0_14 = arith.constant 0 : index
    %39 = vector.load %arg4[%c0_13, %c0_14] : memref<16x128xf32, #tpu.memory_space<vmem>>, vector<16x128xf32>
    tpu.vector_store %arg4[%c0_13, %c0_14], %38 {strides = array<i32>} : memref<16x128xf32, #tpu.memory_space<vmem>>, vector<16x128xf32>,
    return
  }
  func.func @transform_0(%arg0: i32) -> (i32, i32) {
    %c0_i32 = arith.constant 0 : i32
    %c0_i32_0 = arith.constant 0 : i32
    return %arg0, %c0_i32 : i32, i32
  }
  func.func @transform_1(%arg0: i32) -> (i32, i32) {
    %c0_i32 = arith.constant 0 : i32
    %c0_i32_0 = arith.constant 0 : i32
    %c0_i32_1 = arith.constant 0 : i32
    return %c0_i32, %c0_i32_0 : i32, i32
  }
  func.func @transform_2(%arg0: i32) -> (i32, i32) {
    %c0_i32 = arith.constant 0 : i32
    %c0_i32_0 = arith.constant 0 : i32
    %c0_i32_1 = arith.constant 0 : i32
    return %c0_i32, %c0_i32_0 : i32, i32
  }
  func.func @transform_3(%arg0: i32) -> (i32, i32) {
    %c0_i32 = arith.constant 0 : i32
    %c0_i32_0 = arith.constant 0 : i32
    return %arg0, %c0_i32 : i32, i32
  }
}

</mosaic_0001>

<llo_original>
// kernel: tpu_custom_call.1
$region0: #{tpu_custom_call.1}
  #allocation0 [shape = 'u32[]', space=smem, size = 0x4, offset = 0x4, fixed_abs, tag = 'smem constant byte address 0x4 - core index']
  #allocation1 [shape = 'u32[144,128]{1,0:T(1,128)}', space=vmem, size = 0x12000, scoped, tag = 'internal scratch']
  %s0 = inlined_call_operand.hbm [shape: f32[16,32], index: 0, kind: input, shape index: {}]
  %s1 = inlined_call_operand.hbm [shape: f32[32,128], index: 1, kind: input, shape index: {}]
  %s2 = inlined_call_operand.vmem [shape: f32[3,128], index: 2, kind: input, shape index: {}]
  %s3 = inlined_call_operand.hbm [shape: f32[16,128], index: 3, kind: output, shape index: {}]
  %s4 = sld [smem:[#allocation0]]
  $region30: #{tpu_custom_call.1} parent=0
    _
  %s6 = ssub.s32 1, %s4
  %s7 = scalar_select 0, %s6, %s4
  $region1: #{tpu_custom_call.1} parent=0
    #allocation2 [shape = 'u8[8192]{0}', space=vmem, size = 0x2000, scoped, tag = 'input window, operand 0, single buffered']
    #allocation3 [shape = 's32[1]{0}', space=sflag, size = 0x4, scoped, tag = 'scoped memory for tpu_custom_call.1']
    #allocation4 [shape = 's32[1]{0}', space=sflag, size = 0x4, scoped, tag = 'scoped memory for tpu_custom_call.1']
    #allocation5 [shape = 'u8[16384]{0}', space=vmem, size = 0x4000, scoped, tag = 'input window, operand 1, single buffered']
    #allocation6 [shape = 's32[1]{0}', space=sflag, size = 0x4, scoped, tag = 'scoped memory for tpu_custom_call.1']
    #allocation7 [shape = 'u8[8192]{0}', space=vmem, size = 0x2000, scoped, tag = 'output window, operand 0, single buffered']
    %8 = vsyncpa [#allocation3], 0
    %9 = vsyncpa [#allocation6], 0
    %10 = vsyncpa [#allocation4], 0
    // Predicated region
    $region2: #{tpu_custom_call.1} parent=1 // pred_check
      _
    $region3: #{tpu_custom_call.1} parent=1 // pred_check_branch
      %12 = sbr.rel (0) target = $region5
    $region4: #{tpu_custom_call.1} parent=1 // pred_region
      %s14 = ssub.s32 256, 256
      %15 = vsyncadd [#allocation3], %s14
      %s16 = sshll.u32 [#allocation2], 4
      %s17 = int_to_ptr.vmem [resolvable:$true] %s16
      %22 = dma.hbm_to_vmem [thread:$0]  %s0, 256, %s17, [#allocation3], 128, 128, 8
    $region5: #{tpu_custom_call.1} parent=1 // pred_fallthru
      _
    // Predicated region
    $region6: #{tpu_custom_call.1} parent=1 // pred_check
      _
    $region7: #{tpu_custom_call.1} parent=1 // pred_check_branch
      %24 = sbr.rel (0) target = $region9
    $region8: #{tpu_custom_call.1} parent=1 // pred_region
      %s26 = ssub.s32 512, 512
      %27 = vsyncadd [#allocation6], %s26
      %s28 = sshll.u32 [#allocation5], 4
      %s29 = int_to_ptr.vmem [resolvable:$true] %s28
      %34 = dma.hbm_to_vmem [thread:$0]  %s1, 512, %s29, [#allocation6], 128, 128, 8
    $region9: #{tpu_custom_call.1} parent=1 // pred_fallthru
      _
    // Predicated region
    $region10: #{tpu_custom_call.1} parent=1 // pred_check
      _
    $region11: #{tpu_custom_call.1} parent=1 // pred_check_branch
      %36 = sbr.rel (0) target = $region13
    $region12: #{tpu_custom_call.1} parent=1 // pred_region
      _
    $region13: #{tpu_custom_call.1} parent=1 // pred_fallthru
      _
    // Predicated region
    $region14: #{tpu_custom_call.1} parent=1 // pred_check
      _
    $region15: #{tpu_custom_call.1} parent=1 // pred_check_branch
      %38 = sbr.rel (0) target = $region17
    $region16: #{tpu_custom_call.1} parent=1 // pred_region
      %39 = dma.done [#allocation3], 256
    $region17: #{tpu_custom_call.1} parent=1 // pred_fallthru
      _
    // Predicated region
    $region18: #{tpu_custom_call.1} parent=1 // pred_check
      _
    $region19: #{tpu_custom_call.1} parent=1 // pred_check_branch
      %41 = sbr.rel (0) target = $region21
    $region20: #{tpu_custom_call.1} parent=1 // pred_region
      %42 = dma.done [#allocation6], 512
    $region21: #{tpu_custom_call.1} parent=1 // pred_fallthru
      _
    %v43 = vld [vmem:[%s2] sm:$0x7]
    %v44 = vld [vmem:[#allocation2] sm:$0xff]
    %v45 = vld [vmem:[#allocation2 + $0x8] sm:$0xff]
    %v46 = vld [vmem:[#allocation5] sm:$0xff]
    %v47 = vld [vmem:[#allocation5 + $0x8] sm:$0xff]
    %v48 = vld [vmem:[#allocation5 + $0x10] sm:$0xff]
    %v49 = vld [vmem:[#allocation5 + $0x18] sm:$0xff]
    %v50 = vlaneseq
    %v51 = vshrl.u32 %v50, 7
    %v52 = vsub.s32 0, %v51
    %v53 = vrot.slane %v43, %v52
    %vm54 = vcmask 261120
    %v56 = vsel %vm54, %v44, 0
    %v59 = vsel %vm54, %v45, 0
    %61 = vmatprep.subr.mxu0 0.0
    %62 = vmatpush1.msra.mxu0 %v46
    %63 = vmatprep.subr.mxu0 0.0
    %64 = vmatpush1.msra.mxu0 %v47
    %65 = vmatprep.subr.mxu0 0.0
    %66 = vmatpush1.msra.mxu0 %v48
    %67 = vmatprep.subr.mxu0 0.0
    %68 = vmatpush1.msra.mxu0 %v49
    %69 = vmatprep.subr.mxu0 0.0
    %70 = vmatpush1.msra.mxu0 0.0
    %71 = vmatprep.subr.mxu0 0.0
    %72 = vmatpush1.msra.mxu0 0.0
    %73 = vmatprep.subr.mxu0 0.0
    %74 = vmatpush1.msra.mxu0 0.0
    %75 = vmatprep.subr.mxu0 0.0
    %76 = vmatpush1.msra.mxu0 0.0
    %77 = vmatprep.subr.mxu0 0.0
    %78 = vmatpush1.msra.mxu0 0.0
    %79 = vmatprep.subr.mxu0 0.0
    %80 = vmatpush1.msra.mxu0 0.0
    %81 = vmatprep.subr.mxu0 0.0
    %82 = vmatpush1.msra.mxu0 0.0
    %83 = vmatprep.subr.mxu0 0.0
    %84 = vmatpush1.msra.mxu0 0.0
    %85 = vmatprep.subr.mxu0 0.0
    %86 = vmatpush1.msra.mxu0 0.0
    %87 = vmatprep.subr.mxu0 0.0
    %88 = vmatpush1.msra.mxu0 0.0
    %89 = vmatprep.subr.mxu0 0.0
    %90 = vmatpush1.msra.mxu0 0.0
    %91 = vmatprep.subr.mxu0 0.0
    %92 = vmatpush1.msra.mxu0 0.0
    %93 = vmatprep.subr.mxu0 0.0
    %94 = vmatpush1.msra.mxu0 0.0
    %95 = vmatprep.subr.mxu0 0.0
    %96 = vmatpush1.msra.mxu0 0.0
    %97 = vmatprep.subr.mxu0 0.0
    %98 = vmatpush1.msra.mxu0 0.0
    %99 = vmatprep.subr.mxu0 0.0
    %100 = vmatpush1.msra.mxu0 0.0
    %101 = vmatprep.subr.mxu0 0.0
    %102 = vmatpush1.msra.mxu0 0.0
    %103 = vmatprep.subr.mxu0 0.0
    %104 = vmatpush1.msra.mxu0 0.0
    %105 = vmatprep.subr.mxu0 0.0
    %106 = vmatpush1.msra.mxu0 0.0
    %107 = vmatprep.subr.mxu0 0.0
    %108 = vmatpush1.msra.mxu0 0.0
    %109 = vmatprep.subr.mxu0 0.0
    %110 = vmatpush1.msra.mxu0 0.0
    %111 = vmatprep.subr.mxu0 0.0
    %112 = vmatpush1.msra.mxu0 0.0
    %113 = vmatprep.subr.mxu0 0.0
    %114 = vmatpush1.msra.mxu0 0.0
    %115 = vmatprep.subr.mxu0 0.0
    %116 = vmatpush1.msra.mxu0 0.0
    %117 = vmatprep.subr.mxu0 0.0
    %118 = vmatpush1.msra.mxu0 0.0
    %119 = vmatprep.subr.mxu0 0.0
    %120 = vmatpush1.msra.mxu0 0.0
    %121 = vmatprep.subr.mxu0 0.0
    %122 = vmatpush1.msra.mxu0 0.0
    %123 = vmatprep.subr.mxu0 0.0
    %124 = vmatpush1.msra.mxu0 0.0
    %125 = vmatprep.mubr.f32.mxu0 0.0
    %126 = vmatmul.mubr.f32.gmra.mrb[0].mxu0 %v56
    %v127 = vpop.f32.mrb[0].mxu0
    %v128 = vadd.f32 %v53, %v127
    %v129 = vpop.f32.mrb[0].mxu0
    %130 = vmatprep.mubr.f32.mxu0 0.0
    %131 = vmatmul.mubr.f32.gmra.mrb[0].mxu0 %v59
    %v132 = vpop.f32.mrb[0].mxu0
    %v133 = vadd.f32 %v53, %v132
    %v134 = vpop.f32.mrb[0].mxu0
    %135 = vdwg.mxu0
    %v136 = vmul.f32 %v128, 0.5
    %v137 = vmul.f32 %v133, 0.5
    %v138 = vmul.f32 %v128, 0.70710677
    %v139 = vmul.f32 %v133, 0.70710677
    %v140 = verf.f32.pop %v138
    %v141 = verf.f32.pop %v139
    %v142 = vadd.f32 %v140, 1.0
    %v143 = vadd.f32 %v141, 1.0
    %v144 = vmul.f32 %v136, %v142
    %v145 = vmul.f32 %v137, %v143
    %146 = vadd.xlane.f32.xlu0 %v144
    %v147 = vpop.xlane.xlu0 %146
    %148 = vadd.xlane.f32.xlu0 %v145
    %v149 = vpop.xlane.xlu0 %148
    %v150 = vmul.f32 %v144, %v144
    %v151 = vmul.f32 %v145, %v145
    %152 = vadd.xlane.f32.xlu0 %v150
    %v153 = vpop.xlane.xlu0 %152
    %154 = vadd.xlane.f32.xlu0 %v151
    %v155 = vpop.xlane.xlu0 %154
    %v156 = vmul.f32 %v147, 0.0078125
    %v157 = vmul.f32 %v149, 0.0078125
    %v158 = vmul.f32 %v153, 0.0078125
    %v159 = vmul.f32 %v155, 0.0078125
    %v160 = vmul.f32 %v156, %v156
    %v161 = vmul.f32 %v157, %v157
    %v162 = vsub.f32 %v158, %v160
    %v163 = vsub.f32 %v159, %v161
    %v164 = vsub.f32 %v144, %v156
    %v165 = vsub.f32 %v145, %v157
    %v166 = vadd.f32 %v162, 1e-05
    %v167 = vadd.f32 %v163, 1e-05
    %v168 = vrsqrt.pop %v166
    %v169 = vrsqrt.pop %v167
    %v170 = vmul.f32 %v164, %v168
    %v171 = vmul.f32 %v165, %v169
    %v172 = vlaneseq
    %v173 = vshrl.u32 %v172, 7
    %v174 = vsub.s32 1, %v173
    %v175 = vrot.slane %v43, %v174
    %v176 = vmul.f32 %v170, %v175
    %v177 = vmul.f32 %v171, %v175
    %v178 = vlaneseq
    %v179 = vshrl.u32 %v178, 7
    %v180 = vsub.s32 2, %v179
    %v181 = vrot.slane %v43, %v180
    %v182 = vadd.f32 %v176, %v181
    %v183 = vadd.f32 %v177, %v181
    %184 = vst [vmem:[#allocation7] sm:$0xff] %v182
    %185 = vst [vmem:[#allocation7 + $0x8] sm:$0xff] %v183
    // Predicated region
    $region22: #{tpu_custom_call.1} parent=1 // pred_check
      _
    $region23: #{tpu_custom_call.1} parent=1 // pred_check_branch
      %187 = sbr.rel (0) target = $region25
    $region24: #{tpu_custom_call.1} parent=1 // pred_region
      %s189 = ssub.s32 256, 256
      %190 = vsyncadd [#allocation4], %s189
      %s191 = sshll.u32 [#allocation7], 4
      %s192 = int_to_ptr.vmem [resolvable:$true] %s191
      %197 = dma.vmem_to_hbm [thread:$0]  %s192, 256, %s3, [#allocation4], 128, 128, 8
    $region25: #{tpu_custom_call.1} parent=1 // pred_fallthru
      _
    // Predicated region
    $region26: #{tpu_custom_call.1} parent=1 // pred_check
      _
    $region27: #{tpu_custom_call.1} parent=1 // pred_check_branch
      %199 = sbr.rel (0) target = $region29
    $region28: #{tpu_custom_call.1} parent=1 // pred_region
      %200 = dma.done [#allocation4], 256
    $region29: #{tpu_custom_call.1} parent=1 // pred_fallthru
      _
    %201 = vsyncpa [#allocation3], 1
    %202 = vsyncpa [#allocation6], 1
    %203 = vsyncpa [#allocation4], 1

</llo_original>
